<compile_context>
chip_gen: v6e
topology: v6e:2x2x1
jax: 0.10.0
libtpu: 0.0.40
codegen_flags: <defaults>
</compile_context>

<pallas_src>
import jax
import jax.numpy as jnp
from jax.experimental import pallas as pl
from jax.experimental.pallas import tpu as pltpu


# ---------------------------------------------------------------------------
# Kernel body
# ---------------------------------------------------------------------------
def _identity_tile_kernel(x_ref, o_ref):
    # Eval-mode dropout == identity: copy the current tile.
    # TODO(synk): training-mode dropout (p > 0) goes here: seed per grid step
    # (pltpu.prng_seed(seed + pl.program_id(0)) or pltpu.sample_block for
    # grid-invariant sampling), draw pltpu.prng_random_bits, jnp.where-mask
    # and scale by 1/(1-p). The VPU work hides fully under the HBM stream,
    # so the tiling below applies unchanged.
    o_ref[...] = x_ref[...]


# ---------------------------------------------------------------------------
# Tiling helpers
# ---------------------------------------------------------------------------
_TILE_BYTES = 4 << 20          # ~4 MiB per buffer (feedback: amortize step overhead)
_VMEM_LIMIT = 48 << 20         # safe on v5e/v6e (128 MiB) and v7x (64 MiB physical)


def _pick_lane_width(total):
    """Largest lane-dense width (multiple of 128) that divides `total`."""
    for w in (4096, 2048, 1024, 512, 256, 128):
        if total % w == 0:
            return w
    return None


def _sublane_multiple(dtype):
    """Row multiple needed for an unmasked sublane layout of this dtype."""
    return {4: 8, 2: 16, 1: 32}.get(jnp.dtype(dtype).itemsize, 8)


def _pick_tile_rows(rows, w, itemsize, sub):
    """Tile-row count: <= ~4 MiB/buffer, sublane multiple, exact divisor if possible."""
    target = max(sub, _TILE_BYTES // (w * itemsize))
    if rows <= target:
        return rows  # single full-extent block (exempt from the (8,128) rule)
    # Prefer an exact divisor of `rows` -> no masked partial last tile.
    t = max(sub, (target // sub) * sub)
    while t >= sub:
        if rows % t == 0:
            return t
        t -= sub
    # Fallback: non-divisor tile, last grid step is a masked partial store.
    return max(sub, (target // sub) * sub)


# ---------------------------------------------------------------------------
# Pallas identity-copy (kept only as the op-boundary / training-mode scaffold)
# ---------------------------------------------------------------------------
def _identity_copy_pallas(x):
    orig_shape = x.shape
    total = x.size
    if total == 0:
        return x
    itemsize = jnp.dtype(x.dtype).itemsize

    w = _pick_lane_width(total)
    if w is None:
        # Degenerate size (not a multiple of 128 elements): eval dropout is
        # the identity, so skip the device copy entirely.
        return x

    rows = total // w
    # Row-major contiguity is preserved -> this reshape is a free bitcast for
    # a contiguous input (a sharded/transposed layout would copy here).
    x2 = x.reshape(rows, w)

    sub = _sublane_multiple(x.dtype)
    tr = _pick_tile_rows(rows, w, itemsize, sub)
    tr = max(tr, 1)
    grid = (pl.cdiv(rows, tr),)
    # Note (v7x): at production shapes grid has many steps, so both
    # TensorCores get work under dimension_semantics=("parallel",). A 1-step
    # grid only occurs when the whole array fits in one ~4 MiB tile, where
    # single-TC copy cost is negligible anyway.

    out2 = pl.pallas_call(
        _identity_tile_kernel,
        out_shape=jax.ShapeDtypeStruct((rows, w), x.dtype),
        grid_spec=pltpu.PrefetchScalarGridSpec(
            num_scalar_prefetch=0,
            grid=grid,
            in_specs=[pl.BlockSpec((tr, w), lambda i: (i, 0))],
            out_specs=pl.BlockSpec((tr, w), lambda i: (i, 0)),
        ),
        # No input_output_aliases: the caller does not donate x, and aliasing
        # a non-donated input would force XLA to insert a defensive copy
        # (3x traffic instead of 2x).
        compiler_params=pltpu.CompilerParams(
            dimension_semantics=("parallel",),
            vmem_limit_bytes=_VMEM_LIMIT,
        ),
    )(x2)

    return out2.reshape(orig_shape)


# ---------------------------------------------------------------------------
# Public forward (matches EmbDrop.forward semantics)
# ---------------------------------------------------------------------------
def emb_drop(x, *, keep_op_boundary=False):
    """EmbDrop forward: nn.Dropout in .eval() mode -> identity.

    Default path returns x directly (zero HBM traffic, no kernel launch) --
    the dominant optimization for an eval-mode dropout.  Set
    keep_op_boundary=True to keep a real pallas_call in the graph (lane-dense
    tiled identity copy), which is the scaffold for a future training-mode
    (p > 0) dropout kernel.
    """
    if not keep_op_boundary:
        return x
    return _identity_copy_pallas(x)


# ---------------------------------------------------------------------------
# Self-test
# ---------------------------------------------------------------------------
if __name__ == "__main__":
    key = jax.random.PRNGKey(0)
    k1, k2 = jax.random.split(key)

    # Small shape consistent with the module's forward: embeddings of
    # (batch=2, seq=8, hidden=32).
    B, S, D = 2, 8, 32
    x = jax.random.normal(k1, (B, S, D), dtype=jnp.float32)
    x_expected = jax.device_get(x)

    # Fast production path: pure identity, no kernel launch.
    y_fast = emb_drop(x)
    jax.block_until_ready(y_fast)
    assert y_fast.shape == (B, S, D) and y_fast.dtype == jnp.float32
    assert bool(jnp.allclose(y_fast, jnp.asarray(x_expected)))

    # Kernel path (op-boundary / training-mode scaffold): run the pallas_call.
    y = emb_drop(x, keep_op_boundary=True)
    jax.block_until_ready(y)
    assert y.shape == (B, S, D) and y.dtype == jnp.float32
    assert bool(jnp.allclose(y, jnp.asarray(x_expected))), \
        "eval-mode dropout must be identity"

    # Secondary check exercising the multi-tile grid (2 steps at 4 MiB tiles).
    x_big = jax.random.normal(k2, (16, 256, 512), dtype=jnp.float32)
    x_big_expected = jax.device_get(x_big)
    y_big = emb_drop(x_big, keep_op_boundary=True)
    jax.block_until_ready(y_big)
    assert y_big.shape == x_big.shape and y_big.dtype == x_big.dtype
    assert bool(jnp.allclose(y_big, jnp.asarray(x_big_expected)))

    print("KERNEL_OK")
</pallas_src>

<mosaic_0001>
module attributes {stable_mosaic.version = 11 : i64} {
  func.func @_identity_tile_kernel(%arg0: i32, %arg1: memref<1x512xf32, #tpu.memory_space<vmem>>, %arg2: memref<1x512xf32, #tpu.memory_space<vmem>>) attributes {dimension_semantics = [#tpu.dimension_semantics<parallel>], iteration_bounds = array<i64: 1>, scalar_prefetch = 0 : i64, scratch_operands = 0 : i64, tpu.core_type = #tpu.core_type<tc>, window_params = [{transform_indices = @transform_0, window_bounds = array<i64: 1, 512>}, {transform_indices = @transform_1, window_bounds = array<i64: 1, 512>}]} {
    %c0 = arith.constant 0 : index
    %c0_0 = arith.constant 0 : index
    %0 = vector.load %arg1[%c0, %c0_0] : memref<1x512xf32, #tpu.memory_space<vmem>>, vector<1x512xf32>
    %c0_1 = arith.constant 0 : index
    %c0_2 = arith.constant 0 : index
    %1 = vector.load %arg2[%c0_1, %c0_2] : memref<1x512xf32, #tpu.memory_space<vmem>>, vector<1x512xf32>
    tpu.vector_store %arg2[%c0_1, %c0_2], %0 {strides = array<i32>} : memref<1x512xf32, #tpu.memory_space<vmem>>, vector<1x512xf32>,
    return
  }
  func.func @transform_0(%arg0: i32) -> (i32, i32) {
    %c0_i32 = arith.constant 0 : i32
    %c0_i32_0 = arith.constant 0 : i32
    return %arg0, %c0_i32 : i32, i32
  }
  func.func @transform_1(%arg0: i32) -> (i32, i32) {
    %c0_i32 = arith.constant 0 : i32
    %c0_i32_0 = arith.constant 0 : i32
    return %arg0, %c0_i32 : i32, i32
  }
}

</mosaic_0001>

<llo_original>
// kernel: tpu_custom_call.1
$region0: #{tpu_custom_call.1}
  #allocation0 [shape = 'u32[]', space=smem, size = 0x4, offset = 0x4, fixed_abs, tag = 'smem constant byte address 0x4 - core index']
  #allocation1 [shape = 'u32[144,128]{1,0:T(1,128)}', space=vmem, size = 0x12000, scoped, tag = 'internal scratch']
  %s0 = inlined_call_operand.hbm [shape: f32[1,512], index: 0, kind: input, shape index: {}]
  %s1 = inlined_call_operand.hbm [shape: f32[1,512], index: 1, kind: output, shape index: {}]
  %s2 = sld [smem:[#allocation0]]
  $region18: #{tpu_custom_call.1} parent=0
    _
  %s4 = ssub.s32 1, %s2
  %s5 = scalar_select 0, %s4, %s2
  $region1: #{tpu_custom_call.1} parent=0
    #allocation2 [shape = 'u8[2048]{0}', space=vmem, size = 0x800, scoped, tag = 'input window, operand 0, single buffered']
    #allocation3 [shape = 's32[1]{0}', space=sflag, size = 0x4, scoped, tag = 'scoped memory for tpu_custom_call.1']
    #allocation4 [shape = 's32[1]{0}', space=sflag, size = 0x4, scoped, tag = 'scoped memory for tpu_custom_call.1']
    #allocation5 [shape = 'u8[2048]{0}', space=vmem, size = 0x800, scoped, tag = 'output window, operand 0, single buffered']
    %6 = vsyncpa [#allocation3], 0
    %7 = vsyncpa [#allocation4], 0
    // Predicated region
    $region2: #{tpu_custom_call.1} parent=1 // pred_check
      _
    $region3: #{tpu_custom_call.1} parent=1 // pred_check_branch
      %9 = sbr.rel (0) target = $region5
    $region4: #{tpu_custom_call.1} parent=1 // pred_region
      %s11 = ssub.s32 64, 64
      %12 = vsyncadd [#allocation3], %s11
      %s14 = sshll.u32 [#allocation2], 4
      %s15 = int_to_ptr.vmem [resolvable:$true] %s14
      %17 = dma.hbm_to_vmem [thread:$0]  %s0, 64, %s15, [#allocation3]
    $region5: #{tpu_custom_call.1} parent=1 // pred_fallthru
      _
    // Predicated region
    $region6: #{tpu_custom_call.1} parent=1 // pred_check
      _
    $region7: #{tpu_custom_call.1} parent=1 // pred_check_branch
      %19 = sbr.rel (0) target = $region9
    $region8: #{tpu_custom_call.1} parent=1 // pred_region
      %20 = dma.done [#allocation3], 64
    $region9: #{tpu_custom_call.1} parent=1 // pred_fallthru
      _
    %v21 = vld [vmem:[#allocation2] sm:$0xf]
    %v22 = vlaneseq
    %vm23 = vcmp.ge.s32.totalorder %v22, 0
    %vm24 = vcmp.lt.s32.totalorder %v22, 512
    %vm25 = vmand %vm23, %vm24
    %26 = vst.msk [vmem:[#allocation5] sm:$0xf] %vm25, %v21
    // Predicated region
    $region10: #{tpu_custom_call.1} parent=1 // pred_check
      _
    $region11: #{tpu_custom_call.1} parent=1 // pred_check_branch
      %28 = sbr.rel (0) target = $region13
    $region12: #{tpu_custom_call.1} parent=1 // pred_region
      %s30 = ssub.s32 64, 64
      %31 = vsyncadd [#allocation4], %s30
      %s33 = sshll.u32 [#allocation5], 4
      %s34 = int_to_ptr.vmem [resolvable:$true] %s33
      %36 = dma.vmem_to_hbm [thread:$0]  %s34, 64, %s1, [#allocation4]
    $region13: #{tpu_custom_call.1} parent=1 // pred_fallthru
      _
    // Predicated region
    $region14: #{tpu_custom_call.1} parent=1 // pred_check
      _
    $region15: #{tpu_custom_call.1} parent=1 // pred_check_branch
      %38 = sbr.rel (0) target = $region17
    $region16: #{tpu_custom_call.1} parent=1 // pred_region
      %39 = dma.done [#allocation4], 64
    $region17: #{tpu_custom_call.1} parent=1 // pred_fallthru
      _
    %40 = vsyncpa [#allocation3], 1
    %41 = vsyncpa [#allocation4], 1

</llo_original>
